<compile_context>
chip_gen: v5e
topology: v5e:2x2
jax: 0.10.0
libtpu: 0.0.40
codegen_flags: <defaults>
</compile_context>

<pallas_src>
import functools

import jax
import jax.numpy as jnp
from jax.experimental import pallas as pl
from jax.experimental.pallas import tpu as pltpu


_MiB = 1024 * 1024


def _acc_kernel(logits_ref, labels_ref, correct_ref, valid_ref, *, ignore_index):
    i = pl.program_id(1)

    @pl.when(i == 0)
    def _():
        correct_ref[...] = jnp.zeros_like(correct_ref)
        valid_ref[...] = jnp.zeros_like(valid_ref)

    x = logits_ref[...]                                     # (row_tile, V) native dtype
    vocab = x.shape[-1]

    # argmax over the vocab (lane) axis, first index on ties.  Comparing in
    # the native dtype matches torch's `logits.float().argmax(-1)` because
    # the up-cast is monotonic and exact.
    col = jax.lax.broadcasted_iota(jnp.int32, x.shape, 1)
    max_v = jnp.max(x, axis=-1, keepdims=True)              # (row_tile, 1)
    idx = jnp.where(x == max_v, col, jnp.int32(vocab))
    preds = jnp.min(idx, axis=-1, keepdims=True)            # (row_tile, 1) int32

    labels = labels_ref[...]                                # (row_tile, 1) int32
    valid = labels != jnp.int32(ignore_index)
    correct = jnp.logical_and(preds == labels, valid)

    # Plain per-row elementwise accumulation into the resident output block:
    # no cross-sublane reduce and no tiny (1,1) masked store per grid step.
    correct_ref[...] += correct.astype(jnp.int32)
    valid_ref[...] += valid.astype(jnp.int32)


def _chip_plan():
    """Returns (vmem_limit_bytes, vmem_target_bytes, num_cores, core_axis_sem)."""
    kind = ""
    try:
        kind = jax.devices()[0].device_kind.lower()
    except Exception:
        pass
    if "v7" in kind:
        # 64 MiB VMEM per TensorCore; actually shard the token loop across
        # both cores.
        return 48 * _MiB, 40 * _MiB, 2, pltpu.CORE_PARALLEL
    if "v6" in kind:
        return 96 * _MiB, 80 * _MiB, 1, pltpu.ARBITRARY
    if "v5" in kind or "v4" in kind:
        return 64 * _MiB, 52 * _MiB, 1, pltpu.ARBITRARY
    # Unknown chip: conservative sizing that fits a 64 MiB VMEM part.
    return 48 * _MiB, 40 * _MiB, 1, pltpu.ARBITRARY


def _choose_row_tile(n_tok, vocab, itemsize, vmem_target):
    """Largest row tile (multiple of 8) whose working set fits the VMEM target."""
    v_lane = pl.cdiv(vocab, 128) * 128                      # lane-padded vocab in VMEM
    # Per-row VMEM bytes:
    #   * logits block, double-buffered, native dtype        : 2 * itemsize * v_lane
    #   * in-kernel int32 argmax temporaries (iota + idx)    : 8 * v_lane
    #   * lane-padded labels (x2 buffers) + two int32 accums : ~6 * 128 * 4
    per_row = v_lane * (2 * itemsize + 8) + 6 * 128 * 4
    rt = vmem_target // per_row
    rt = max(8, (rt // 8) * 8)
    # No artificial cap, but never allocate more rows than the token count needs.
    rt = min(rt, pl.cdiv(n_tok, 8) * 8)
    return max(rt, 8)


def train_accuracy_pallas(logits, labels, ignore_index: int = -100):
    """logits: (..., V) float; labels: (...) int.  Returns scalar float32 accuracy."""
    vocab = logits.shape[-1]
    logits2d = logits.reshape(-1, vocab)                    # no pad, no dtype cast
    labels1d = labels.reshape(-1).astype(jnp.int32)
    n_tok = logits2d.shape[0]
    itemsize = jnp.dtype(logits.dtype).itemsize

    vmem_limit, vmem_target, num_cores, core_sem = _chip_plan()
    row_tile = _choose_row_tile(n_tok, vocab, itemsize, vmem_target)

    n_tiles = pl.cdiv(n_tok, row_tile)                      # real (possibly partial) tiles
    tiles_per_core = pl.cdiv(n_tiles, num_cores)
    total_rows = num_cores * tiles_per_core * row_tile

    # Labels are tiny: pad with ignore_index so every grid step sees an
    # in-bounds label block; padded / duplicated / out-of-bounds logits rows
    # then contribute nothing to either count.
    labels2d = jnp.pad(
        labels1d, (0, total_rows - n_tok), constant_values=ignore_index
    ).reshape(total_rows, 1)

    def logits_map(c, i):
        # Clamp so no block starts past the real data; duplicated reads are
        # neutralised by the ignore_index label padding.
        return (jnp.minimum(c * tiles_per_core + i, n_tiles - 1), 0)

    def labels_map(c, i):
        return (c * tiles_per_core + i, 0)

    kernel = functools.partial(_acc_kernel, ignore_index=ignore_index)

    cost = pl.CostEstimate(
        flops=2 * n_tok * vocab,
        transcendentals=0,
        bytes_accessed=n_tok * vocab * itemsize
        + total_rows * 4
        + 2 * num_cores * row_tile * 4,
    )

    correct, valid = pl.pallas_call(
        kernel,
        out_shape=(
            jax.ShapeDtypeStruct((num_cores * row_tile, 1), jnp.int32),
            jax.ShapeDtypeStruct((num_cores * row_tile, 1), jnp.int32),
        ),
        grid_spec=pltpu.PrefetchScalarGridSpec(
            num_scalar_prefetch=0,
            grid=(num_cores, tiles_per_core),
            in_specs=[
                pl.BlockSpec((row_tile, vocab), logits_map),
                pl.BlockSpec((row_tile, 1), labels_map),
            ],
            out_specs=[
                pl.BlockSpec((row_tile, 1), lambda c, i: (c, 0)),
                pl.BlockSpec((row_tile, 1), lambda c, i: (c, 0)),
            ],
        ),
        compiler_params=pltpu.CompilerParams(
            dimension_semantics=(core_sem, pltpu.ARBITRARY),
            vmem_limit_bytes=vmem_limit,
        ),
        cost_estimate=cost,
    )(logits2d, labels2d)

    # Exact int32 counts; divide in float32 (0/0 -> NaN, matching torch).
    correct_total = jnp.sum(correct).astype(jnp.float32)
    valid_total = jnp.sum(valid).astype(jnp.float32)
    return correct_total / valid_total


if __name__ == "__main__":
    key = jax.random.PRNGKey(0)
    k_logits, k_labels, k_mask = jax.random.split(key, 3)

    B, S, V = 2, 8, 32
    ignore_index = -100

    logits = jax.random.normal(k_logits, (B, S, V), dtype=jnp.float32)
    labels = jax.random.randint(k_labels, (B, S), 0, V, dtype=jnp.int32)
    # Sprinkle some ignored positions.
    drop = jax.random.bernoulli(k_mask, p=0.25, shape=(B, S))
    labels = jnp.where(drop, jnp.int32(ignore_index), labels)

    acc = train_accuracy_pallas(logits, labels, ignore_index=ignore_index)
    acc = jax.block_until_ready(acc)

    # Pure-JAX reference check.
    valid_mask = labels != ignore_index
    preds = jnp.argmax(logits.astype(jnp.float32), axis=-1).astype(jnp.int32)
    correct = (preds == labels) & valid_mask
    ref = correct.sum().astype(jnp.float32) / valid_mask.sum().astype(jnp.float32)

    assert jnp.allclose(acc, ref, atol=1e-6), (acc, ref)
    print("KERNEL_OK")
</pallas_src>

<mosaic_0001>
module attributes {stable_mosaic.version = 11 : i64} {
  func.func @_acc_kernel(%arg0: i32, %arg1: i32, %arg2: memref<16x32xf32, #tpu.memory_space<vmem>>, %arg3: memref<16x1xi32, #tpu.memory_space<vmem>>, %arg4: memref<16x1xi32, #tpu.memory_space<vmem>>, %arg5: memref<16x1xi32, #tpu.memory_space<vmem>>) attributes {dimension_semantics = [#tpu.dimension_semantics<arbitrary>, #tpu.dimension_semantics<arbitrary>], iteration_bounds = array<i64: 1, 1>, scalar_prefetch = 0 : i64, scratch_operands = 0 : i64, tpu.core_type = #tpu.core_type<tc>, window_params = [{transform_indices = @transform_0, window_bounds = array<i64: 16, 32>}, {transform_indices = @transform_1, window_bounds = array<i64: 16, 1>}, {transform_indices = @transform_2, window_bounds = array<i64: 16, 1>}, {transform_indices = @transform_3, window_bounds = array<i64: 16, 1>}]} {
    %c0_i32 = arith.constant 0 : i32
    %0 = arith.cmpi eq, %arg1, %c0_i32 : i32
    %1 = arith.extui %0 : i1 to i32
    %c0_i32_0 = arith.constant 0 : i32
    %2 = arith.cmpi ne, %1, %c0_i32_0 : i32
    scf.if %2 {
      %c0_i32_13 = arith.constant 0 : i32
      %26 = vector.broadcast %c0_i32_13 : i32 to vector<16x1xi32>
      %c0_14 = arith.constant 0 : index
      %c0_15 = arith.constant 0 : index
      %27 = vector.load %arg4[%c0_14, %c0_15] : memref<16x1xi32, #tpu.memory_space<vmem>>, vector<16x1xi32>
      tpu.vector_store %arg4[%c0_14, %c0_15], %26 {strides = array<i32>} : memref<16x1xi32, #tpu.memory_space<vmem>>, vector<16x1xi32>,
      %c0_i32_16 = arith.constant 0 : i32
      %28 = vector.broadcast %c0_i32_16 : i32 to vector<16x1xi32>
      %c0_17 = arith.constant 0 : index
      %c0_18 = arith.constant 0 : index
      %29 = vector.load %arg5[%c0_17, %c0_18] : memref<16x1xi32, #tpu.memory_space<vmem>>, vector<16x1xi32>
      tpu.vector_store %arg5[%c0_17, %c0_18], %28 {strides = array<i32>} : memref<16x1xi32, #tpu.memory_space<vmem>>, vector<16x1xi32>,
    } else {
    }
    %c0 = arith.constant 0 : index
    %c0_1 = arith.constant 0 : index
    %3 = vector.load %arg2[%c0, %c0_1] : memref<16x32xf32, #tpu.memory_space<vmem>>, vector<16x32xf32>
    %4 = tpu.iota {dimensions = array<i32: 1>} : vector<16x32xi32>
    %cst = arith.constant dense<0xFF800000> : vector<16xf32>
    %5 = vector.multi_reduction <maximumf>, %3, %cst [1] : vector<16x32xf32> to vector<16xf32>
    %6 = vector.shape_cast %5 : vector<16xf32> to vector<16x1xf32>
    %7 = vector.broadcast %6 : vector<16x1xf32> to vector<16x32xf32>
    %8 = arith.cmpf oeq, %3, %7 : vector<16x32xf32>
    %c32_i32 = arith.constant 32 : i32
    %9 = vector.broadcast %c32_i32 : i32 to vector<16x32xi32>
    %10 = arith.select %8, %4, %9 : vector<16x32xi1>, vector<16x32xi32>
    %cst_2 = arith.constant dense<2147483647> : vector<16xi32>
    %11 = vector.multi_reduction <minsi>, %10, %cst_2 [1] : vector<16x32xi32> to vector<16xi32>
    %12 = vector.shape_cast %11 : vector<16xi32> to vector<16x1xi32>
    %c0_3 = arith.constant 0 : index
    %c0_4 = arith.constant 0 : index
    %13 = vector.load %arg3[%c0_3, %c0_4] : memref<16x1xi32, #tpu.memory_space<vmem>>, vector<16x1xi32>
    %c-100_i32 = arith.constant -100 : i32
    %14 = vector.broadcast %c-100_i32 : i32 to vector<16x1xi32>
    %15 = arith.cmpi ne, %13, %14 : vector<16x1xi32>
    %16 = arith.cmpi eq, %12, %13 : vector<16x1xi32>
    %17 = arith.andi %16, %15 : vector<16x1xi1>
    %c0_5 = arith.constant 0 : index
    %c0_6 = arith.constant 0 : index
    %18 = vector.load %arg4[%c0_5, %c0_6] : memref<16x1xi32, #tpu.memory_space<vmem>>, vector<16x1xi32>
    %19 = arith.extui %17 : vector<16x1xi1> to vector<16x1xi32>
    %20 = arith.addi %18, %19 : vector<16x1xi32>
    %c0_7 = arith.constant 0 : index
    %c0_8 = arith.constant 0 : index
    %21 = vector.load %arg4[%c0_7, %c0_8] : memref<16x1xi32, #tpu.memory_space<vmem>>, vector<16x1xi32>
    tpu.vector_store %arg4[%c0_7, %c0_8], %20 {strides = array<i32>} : memref<16x1xi32, #tpu.memory_space<vmem>>, vector<16x1xi32>,
    %c0_9 = arith.constant 0 : index
    %c0_10 = arith.constant 0 : index
    %22 = vector.load %arg5[%c0_9, %c0_10] : memref<16x1xi32, #tpu.memory_space<vmem>>, vector<16x1xi32>
    %23 = arith.extui %15 : vector<16x1xi1> to vector<16x1xi32>
    %24 = arith.addi %22, %23 : vector<16x1xi32>
    %c0_11 = arith.constant 0 : index
    %c0_12 = arith.constant 0 : index
    %25 = vector.load %arg5[%c0_11, %c0_12] : memref<16x1xi32, #tpu.memory_space<vmem>>, vector<16x1xi32>
    tpu.vector_store %arg5[%c0_11, %c0_12], %24 {strides = array<i32>} : memref<16x1xi32, #tpu.memory_space<vmem>>, vector<16x1xi32>,
    return
  }
  func.func @transform_0(%arg0: i32, %arg1: i32) -> (i32, i32) {
    %c1_i32 = arith.constant 1 : i32
    %0 = arith.muli %arg0, %c1_i32 : i32
    %1 = arith.addi %0, %arg1 : i32
    %c0_i32 = arith.constant 0 : i32
    %2 = arith.minsi %1, %c0_i32 : i32
    %c0_i32_0 = arith.constant 0 : i32
    %c0_i32_1 = arith.constant 0 : i32
    return %2, %c0_i32_0 : i32, i32
  }
  func.func @transform_1(%arg0: i32, %arg1: i32) -> (i32, i32) {
    %c1_i32 = arith.constant 1 : i32
    %0 = arith.muli %arg0, %c1_i32 : i32
    %1 = arith.addi %0, %arg1 : i32
    %c0_i32 = arith.constant 0 : i32
    %c0_i32_0 = arith.constant 0 : i32
    return %1, %c0_i32 : i32, i32
  }
  func.func @transform_2(%arg0: i32, %arg1: i32) -> (i32, i32) {
    %c0_i32 = arith.constant 0 : i32
    %c0_i32_0 = arith.constant 0 : i32
    return %arg0, %c0_i32 : i32, i32
  }
  func.func @transform_3(%arg0: i32, %arg1: i32) -> (i32, i32) {
    %c0_i32 = arith.constant 0 : i32
    %c0_i32_0 = arith.constant 0 : i32
    return %arg0, %c0_i32 : i32, i32
  }
}

</mosaic_0001>

<llo_original>
// kernel: tpu_custom_call.1
$region0: #{tpu_custom_call.1}
  #allocation0 [shape = 'u32[]', space=smem, size = 0x4, offset = 0x4, fixed_abs, tag = 'smem constant byte address 0x4 - core index']
  #allocation1 [shape = 'u32[72,128]{1,0:T(1,128)}', space=vmem, size = 0x9000, scoped, tag = 'internal scratch']
  %s0 = inlined_call_operand.vmem [shape: f32[16,32], index: 0, kind: input, shape index: {}]
  %s1 = inlined_call_operand.vmem [shape: s32[16,1], index: 1, kind: input, shape index: {}]
  %s2 = inlined_call_operand.vmem [shape: s32[16,1], index: 2, kind: output, shape index: {0}]
  %s3 = inlined_call_operand.vmem [shape: s32[16,1], index: 3, kind: output, shape index: {1}]
  %4 = xla_tuple %s2, %s3
  %s5 = sld [smem:[#allocation0]]
  $region30: #{tpu_custom_call.1} parent=0
    _
  %s7 = ssub.s32 1, %s5
  %s8 = scalar_select 0, %s7, %s5
  // Predicated region
  $region2: #{tpu_custom_call.1} parent=0 // pred_check
    _
  $region3: #{tpu_custom_call.1} parent=0 // pred_check_branch
    %10 = sbr.rel (0) target = $region5
  $region4: #{tpu_custom_call.1} parent=0 // pred_region
    %s11 = sadd.s32 0, 0
    %p12 = scmp.lt.s32.totalorder %s11, 0
    %s13 = scalar_select %p12, %s11, 0
    %s14 = smul.u32 2, %s13
    %p15 = scmp.lt.s32.totalorder %s14, 1
    %s16 = scalar_select %p15, %s14, 1
    %s17 = smul.addr %s16, 8
    %s18 = scalar_lea.vmem %s0, %s17
    %s19 = sadd.s32 0, 0
    %p20 = scmp.lt.s32.totalorder %s19, 0
    %s21 = scalar_select %p20, %s19, 0
    %s22 = smul.u32 2, %s21
  $region5: #{tpu_custom_call.1} parent=0 // pred_fallthru
    _
  // Predicated region
  $region6: #{tpu_custom_call.1} parent=0 // pred_check
    _
  $region7: #{tpu_custom_call.1} parent=0 // pred_check_branch
    %24 = sbr.rel (0) target = $region9
  $region8: #{tpu_custom_call.1} parent=0 // pred_region
    %s25 = sadd.s32 0, 0
    %s26 = smul.u32 2, %s25
    %p27 = scmp.lt.s32.totalorder %s26, 1
    %s28 = scalar_select %p27, %s26, 1
    %s29 = smul.addr %s28, 8
    %s30 = scalar_lea.vmem %s1, %s29
    %s31 = sadd.s32 0, 0
    %s32 = smul.u32 2, %s31
  $region9: #{tpu_custom_call.1} parent=0 // pred_fallthru
    _
  %s33 = sadd.s32 0, 0
  %p34 = scmp.lt.s32.totalorder %s33, 0
  %s35 = scalar_select %p34, %s33, 0
  %s36 = smul.u32 2, %s35
  %p37 = scmp.lt.s32.totalorder %s36, 1
  %s38 = scalar_select %p37, %s36, 1
  %s39 = smul.addr %s38, 8
  %s40 = scalar_lea.vmem %s0, %s39
  %s41 = sadd.s32 0, 0
  %s42 = smul.u32 2, %s41
  %p43 = scmp.lt.s32.totalorder %s42, 1
  %s44 = scalar_select %p43, %s42, 1
  %s45 = smul.addr %s44, 8
  %s46 = scalar_lea.vmem %s1, %s45
  %s47 = sadd.s32 0, 0
  %p48 = scmp.lt.s32.totalorder %s47, 0
  %s49 = scalar_select %p48, %s47, 0
  %s50 = smul.u32 2, %s49
  %p51 = scmp.lt.s32.totalorder %s50, 1
  %s52 = scalar_select %p51, %s50, 1
  %s53 = smul.addr %s52, 8
  %s54 = scalar_lea.vmem %s0, %s53
  %s55 = sadd.s32 0, 0
  %p56 = scmp.lt.s32.totalorder %s55, 0
  %s57 = scalar_select %p56, %s55, 0
  %s58 = smul.u32 2, %s57
  %s59 = sadd.s32 0, 0
  %s60 = smul.u32 2, %s59
  %p61 = scmp.lt.s32.totalorder %s60, 1
  %s62 = scalar_select %p61, %s60, 1
  %s63 = smul.addr %s62, 8
  %s64 = scalar_lea.vmem %s1, %s63
  %s65 = sadd.s32 0, 0
  %s66 = smul.u32 2, %s65
  %p67 = scmp.eq.s32.totalorder 0, 0
  // Predicated region
  $region10: #{tpu_custom_call.1} parent=0 // pred_check
    %p68 = pneg %p67
  $region11: #{tpu_custom_call.1} parent=0 // pred_check_branch
    %70 = sbr.rel (%p68) target = $region13
  $region12: #{tpu_custom_call.1} parent=0 // pred_region
    %vm71 = vcmask 7168
    %72 = vst.msk [vmem:[%s2] sm:$0xff] %vm71, 0
    %73 = vst.msk [vmem:[%s2 + $0x8] sm:$0xff] %vm71, 0
    %74 = vst.msk [vmem:[%s3] sm:$0xff] %vm71, 0
    %75 = vst.msk [vmem:[%s3 + $0x8] sm:$0xff] %vm71, 0
  $region13: #{tpu_custom_call.1} parent=0 // pred_fallthru
    _
  %v76 = vld [vmem:[%s54] sm:$0xff]
  %v77 = vld [vmem:[%s54 + $0x8] sm:$0xff]
  %v78 = vlaneseq
  %v79 = vand.u32 %v78, 127
  %vm80 = vcmask 261120
  %v81 = vsel %vm80, %v76, -inf
  %82 = vmax.xlane.f32.xlu0 %v81
  %v83 = vpop.xlane.xlu0 %82
  %v84 = vsel %vm80, %v77, -inf
  %85 = vmax.xlane.f32.xlu0 %v84
  %v86 = vpop.xlane.xlu0 %85
  %vm87 = vcmp.eq.f32.partialorder %v76, %v83
  %vm88 = vcmp.eq.f32.partialorder %v77, %v86
  %v89 = vsel %vm87, %v79, 32
  %v90 = vsel %vm88, %v79, 32
  %v91 = vsel %vm80, %v89, 2147483647
  %v92 = vand.u32 %v91, 65535
  %v93 = vshra.s32 %v91, 16
  %v94 = vcvt.s32.f32 %v92
  %v95 = vcvt.s32.f32 %v93
  %96 = vmin.xlane.f32.xlu0 %v95
  %v97 = vpop.xlane.xlu0 %96
  %vm98 = vcmp.eq.f32.partialorder %v95, %v97
  %v99 = vsel %vm98, %v94, inf
  %100 = vmin.xlane.f32.xlu0 %v99
  %v101 = vpop.xlane.xlu0 %100
  %v102 = vcvt.f32.s32 %v101
  %v103 = vcvt.f32.s32 %v97
  %v104 = vshll.u32 %v103, 16
  %v105 = vadd.s32 %v104, %v102
  %v106 = vsel %vm80, %v90, 2147483647
  %v107 = vand.u32 %v106, 65535
  %v108 = vshra.s32 %v106, 16
  %v109 = vcvt.s32.f32 %v107
  %v110 = vcvt.s32.f32 %v108
  %111 = vmin.xlane.f32.xlu0 %v110
  %v112 = vpop.xlane.xlu0 %111
  %vm113 = vcmp.eq.f32.partialorder %v110, %v112
  %v114 = vsel %vm113, %v109, inf
  %115 = vmin.xlane.f32.xlu0 %v114
  %v116 = vpop.xlane.xlu0 %115
  %v117 = vcvt.f32.s32 %v116
  %v118 = vcvt.f32.s32 %v112
  %v119 = vshll.u32 %v118, 16
  %v120 = vadd.s32 %v119, %v117
  %v121 = vld [vmem:[%s64] sm:$0xff]
  %v122 = vld [vmem:[%s64 + $0x8] sm:$0xff]
  %vm123 = vcmp.ne.s32.totalorder %v121, 4294967196
  %vm124 = vcmp.ne.s32.totalorder %v122, 4294967196
  %vm125 = vcmp.eq.s32.totalorder %v105, %v121
  %vm126 = vcmp.eq.s32.totalorder %v120, %v122
  %vm127 = vmand %vm125, %vm123
  %vm128 = vmand %vm126, %vm124
  %v129 = vld [vmem:[%s2] sm:$0xff]
  %v130 = vld [vmem:[%s2 + $0x8] sm:$0xff]
  %v131 = vsel %vm127, 1, 0
  %v132 = vsel %vm128, 1, 0
  %v133 = vadd.s32 %v129, %v131
  %v134 = vadd.s32 %v130, %v132
  %vm135 = vcmask 7168
  %136 = vst.msk [vmem:[%s2] sm:$0xff] %vm135, %v133
  %137 = vst.msk [vmem:[%s2 + $0x8] sm:$0xff] %vm135, %v134
  %v138 = vld [vmem:[%s3] sm:$0xff]
  %v139 = vld [vmem:[%s3 + $0x8] sm:$0xff]
  %v140 = vsel %vm123, 1, 0
  %v141 = vsel %vm124, 1, 0
  %v142 = vadd.s32 %v138, %v140
  %v143 = vadd.s32 %v139, %v141
  %144 = vst.msk [vmem:[%s3] sm:$0xff] %vm135, %v142
  %145 = vst.msk [vmem:[%s3 + $0x8] sm:$0xff] %vm135, %v143
  // Predicated region
  $region14: #{tpu_custom_call.1} parent=0 // pred_check
    _
  $region15: #{tpu_custom_call.1} parent=0 // pred_check_branch
    %147 = sbr.rel (0) target = $region17
  $region16: #{tpu_custom_call.1} parent=0 // pred_region
    _
  $region17: #{tpu_custom_call.1} parent=0 // pred_fallthru
    _
  // Predicated region
  $region18: #{tpu_custom_call.1} parent=0 // pred_check
    _
  $region19: #{tpu_custom_call.1} parent=0 // pred_check_branch
    %149 = sbr.rel (0) target = $region21
  $region20: #{tpu_custom_call.1} parent=0 // pred_region
    _
  $region21: #{tpu_custom_call.1} parent=0 // pred_fallthru
    _
  // Predicated region
  $region22: #{tpu_custom_call.1} parent=0 // pred_check
    _
  $region23: #{tpu_custom_call.1} parent=0 // pred_check_branch
    %151 = sbr.rel (0) target = $region25
  $region24: #{tpu_custom_call.1} parent=0 // pred_region
    _
  $region25: #{tpu_custom_call.1} parent=0 // pred_fallthru
    _
  // Predicated region
  $region26: #{tpu_custom_call.1} parent=0 // pred_check
    _
  $region27: #{tpu_custom_call.1} parent=0 // pred_check_branch
    %153 = sbr.rel (0) target = $region29
  $region28: #{tpu_custom_call.1} parent=0 // pred_region
    _
  $region29: #{tpu_custom_call.1} parent=0 // pred_fallthru
    _

</llo_original>
